<compile_context>
chip_gen: v5e
topology: v5e:2x2
jax: 0.10.0
libtpu: 0.0.40
codegen_flags: <defaults>
</compile_context>

<pallas_src>
import jax
import jax.numpy as jnp
from jax.experimental import pallas as pl
from jax.experimental.pallas import tpu as pltpu

HIDDEN = 30


def _round_up(x, m):
    return (x + m - 1) // m * m


def cnet_kernel(s_ref, a_ref, ws_ref, wa_ref, b_ref, wo_ref, bo_ref, out_ref):
    """s_ref: (TILE_B, S); a_ref: (TILE_B, A); ws_ref: (S, H); wa_ref: (A, H);
    b_ref, wo_ref: (1, H); bo_ref: (1, 1) scalar in SMEM; out_ref: (TILE_B, 1)."""
    # First layer: two small-K MXU matmuls (f32 accumulate) + fused bias + relu.
    net = jnp.maximum(
        jnp.dot(s_ref[...], ws_ref[...], preferred_element_type=jnp.float32)
        + jnp.dot(a_ref[...], wa_ref[...], preferred_element_type=jnp.float32)
        + b_ref[...],
        0.0)
    # Final Linear(30 -> 1) as VPU mul + lane reduce (VALU/XLU slots are idle).
    q = jnp.sum(net * wo_ref[...], axis=-1, keepdims=True) + bo_ref[0, 0]
    out_ref[...] = q.astype(out_ref.dtype)


def _pick_tile(batch, tile_b):
    """Even batch split: >=2 grid steps when B is big enough (v7x megacore),
    tiles a multiple of 8, capped at tile_b. No HBM padding; the last block
    may be partial (Pallas masks out-of-range rows)."""
    n_tiles = max(pl.cdiv(batch, tile_b), 2 if batch >= 16 else 1)
    tb = _round_up(pl.cdiv(batch, n_tiles), 8)
    return tb, pl.cdiv(batch, tb)


def cnet_forward(s, a, fused_params, *, tile_b=4096):
    """Batch-tiled pallas_call. fused_params = (ws, wa, b, wo_row, bo)."""
    ws, wa, b, wo_row, bo = fused_params
    B = s.shape[0]
    s_dim = ws.shape[0]
    a_dim = wa.shape[0]

    tb, n_tiles = _pick_tile(B, tile_b)

    out = pl.pallas_call(
        cnet_kernel,
        out_shape=jax.ShapeDtypeStruct((B, 1), jnp.float32),
        grid=(n_tiles,),
        in_specs=[
            # batch-tiled activations (auto double-buffered input DMA)
            pl.BlockSpec((tb, s_dim), lambda i: (i, 0)),
            pl.BlockSpec((tb, a_dim), lambda i: (i, 0)),
            # weights / biases: constant index_map -> DMA'd once, VMEM-resident
            pl.BlockSpec((s_dim, HIDDEN), lambda i: (0, 0)),
            pl.BlockSpec((a_dim, HIDDEN), lambda i: (0, 0)),
            pl.BlockSpec((1, HIDDEN), lambda i: (0, 0)),
            pl.BlockSpec((1, HIDDEN), lambda i: (0, 0)),
            # single scalar output bias lives in SMEM (no padded VMEM tile)
            pl.BlockSpec(memory_space=pltpu.MemorySpace.SMEM),
        ],
        out_specs=pl.BlockSpec((tb, 1), lambda i: (i, 0)),
        compiler_params=pltpu.CompilerParams(
            dimension_semantics=("parallel",)),
    )(s, a, ws, wa, b, wo_row, bo)
    return out


def init_cnet_params(key, s_dim, a_dim, hidden=HIDDEN):
    """Deterministic synthetic init mirroring CNet.__init__ shapes.

    PyTorch stores Linear weight as (out, in); we keep the transposed (in, out)
    layout. Weights ~ N(0, 0.1); biases also N(0, 0.1) (synthetic init)."""
    k = jax.random.split(key, 6)
    ws = 0.1 * jax.random.normal(k[0], (s_dim, hidden), jnp.float32)
    bs = 0.1 * jax.random.normal(k[1], (1, hidden), jnp.float32)
    wa = 0.1 * jax.random.normal(k[2], (a_dim, hidden), jnp.float32)
    ba = 0.1 * jax.random.normal(k[3], (1, hidden), jnp.float32)
    wo = 0.1 * jax.random.normal(k[4], (hidden, 1), jnp.float32)
    bo = 0.1 * jax.random.normal(k[5], (1, 1), jnp.float32)
    return ws, bs, wa, ba, wo, bo


def fuse_cnet_params(params):
    """Keep Ws / Wa separate (two in-kernel dots), pre-add bs+ba, flatten wo."""
    ws, bs, wa, ba, wo, bo = params
    b = bs + ba                             # (1, H)
    wo_row = wo.reshape(1, -1)              # (1, H)
    return ws, wa, b, wo_row, bo            # bo: (1, 1)


def cnet_reference(s, a, params):
    """Pure-JAX reference (unfused, matches the PyTorch forward)."""
    ws, bs, wa, ba, wo, bo = params
    net = jnp.maximum(s @ ws + bs + a @ wa + ba, 0.0)
    return net @ wo + bo


if __name__ == "__main__":
    S_DIM, A_DIM = 16, 8
    key = jax.random.PRNGKey(0)
    k_s, k_a, k_p, k_s2, k_a2 = jax.random.split(key, 5)

    params = init_cnet_params(k_p, S_DIM, A_DIM)
    fused = fuse_cnet_params(params)

    # --- small case (B=2), matching the module's typical usage -------------
    B = 2
    s = jax.random.normal(k_s, (B, S_DIM), jnp.float32)
    a = jax.random.normal(k_a, (B, A_DIM), jnp.float32)
    out = jax.block_until_ready(cnet_forward(s, a, fused))
    ref = cnet_reference(s, a, params)
    assert out.shape == (B, 1)
    assert jnp.allclose(out, ref, atol=1e-5, rtol=1e-4), "mismatch vs reference (B=2)"

    # --- larger batch: exercises the 2-tile grid + partial last block ------
    B2 = 600   # splits into tiles of 304 / 296 (masked partial store)
    s2 = jax.random.normal(k_s2, (B2, S_DIM), jnp.float32)
    a2 = jax.random.normal(k_a2, (B2, A_DIM), jnp.float32)
    out2 = jax.block_until_ready(cnet_forward(s2, a2, fused))
    ref2 = cnet_reference(s2, a2, params)
    assert out2.shape == (B2, 1)
    assert jnp.allclose(out2, ref2, atol=1e-5, rtol=1e-4), "mismatch vs reference (B=600)"

    print("KERNEL_OK")
</pallas_src>

<mosaic_0001>
module attributes {stable_mosaic.version = 11 : i64} {
  func.func @cnet_kernel(%arg0: i32, %arg1: memref<8x16xf32, #tpu.memory_space<vmem>>, %arg2: memref<8x8xf32, #tpu.memory_space<vmem>>, %arg3: memref<16x30xf32, #tpu.memory_space<vmem>>, %arg4: memref<8x30xf32, #tpu.memory_space<vmem>>, %arg5: memref<1x30xf32, #tpu.memory_space<vmem>>, %arg6: memref<1x30xf32, #tpu.memory_space<vmem>>, %arg7: memref<1x1xf32, #tpu.memory_space<smem>>, %arg8: memref<8x1xf32, #tpu.memory_space<vmem>>) attributes {dimension_semantics = [#tpu.dimension_semantics<parallel>], iteration_bounds = array<i64: 1>, scalar_prefetch = 0 : i64, scratch_operands = 0 : i64, tpu.core_type = #tpu.core_type<tc>, window_params = [{transform_indices = @transform_0, window_bounds = array<i64: 8, 16>}, {transform_indices = @transform_1, window_bounds = array<i64: 8, 8>}, {pipeline_mode = #tpu.pipeline_mode<synchronous>, transform_indices = @transform_2, window_bounds = array<i64: 16, 30>}, {pipeline_mode = #tpu.pipeline_mode<synchronous>, transform_indices = @transform_3, window_bounds = array<i64: 8, 30>}, {pipeline_mode = #tpu.pipeline_mode<synchronous>, transform_indices = @transform_4, window_bounds = array<i64: 1, 30>}, {pipeline_mode = #tpu.pipeline_mode<synchronous>, transform_indices = @transform_5, window_bounds = array<i64: 1, 30>}, {transform_indices = @transform_6, window_bounds = array<i64: 1, 1>}, {transform_indices = @transform_7, window_bounds = array<i64: 8, 1>}]} {
    %c0 = arith.constant 0 : index
    %c0_0 = arith.constant 0 : index
    %0 = vector.load %arg1[%c0, %c0_0] : memref<8x16xf32, #tpu.memory_space<vmem>>, vector<8x16xf32>
    %c0_1 = arith.constant 0 : index
    %c0_2 = arith.constant 0 : index
    %1 = vector.load %arg3[%c0_1, %c0_2] : memref<16x30xf32, #tpu.memory_space<vmem>>, vector<16x30xf32>
    %cst = arith.constant dense<0.000000e+00> : vector<8x30xf32>
    %2 = tpu.matmul %0, %1, %cst {dimension_numbers = #tpu.dot_dimension_numbers<[1], [0], [0], [1], [0, 0, 1, 1], [], []>} : vector<8x16xf32>, vector<16x30xf32>, vector<8x30xf32> -> vector<8x30xf32>
    %c0_3 = arith.constant 0 : index
    %c0_4 = arith.constant 0 : index
    %3 = vector.load %arg2[%c0_3, %c0_4] : memref<8x8xf32, #tpu.memory_space<vmem>>, vector<8x8xf32>
    %c0_5 = arith.constant 0 : index
    %c0_6 = arith.constant 0 : index
    %4 = vector.load %arg4[%c0_5, %c0_6] : memref<8x30xf32, #tpu.memory_space<vmem>>, vector<8x30xf32>
    %cst_7 = arith.constant dense<0.000000e+00> : vector<8x30xf32>
    %5 = tpu.matmul %3, %4, %cst_7 {dimension_numbers = #tpu.dot_dimension_numbers<[1], [0], [0], [1], [0, 0, 1, 1], [], []>} : vector<8x8xf32>, vector<8x30xf32>, vector<8x30xf32> -> vector<8x30xf32>
    %6 = arith.addf %2, %5 : vector<8x30xf32>
    %c0_8 = arith.constant 0 : index
    %c0_9 = arith.constant 0 : index
    %7 = vector.load %arg5[%c0_8, %c0_9] : memref<1x30xf32, #tpu.memory_space<vmem>>, vector<1x30xf32>
    %8 = vector.broadcast %7 : vector<1x30xf32> to vector<8x30xf32>
    %9 = arith.addf %6, %8 : vector<8x30xf32>
    %cst_10 = arith.constant 0.000000e+00 : f32
    %10 = vector.broadcast %cst_10 : f32 to vector<8x30xf32>
    %11 = arith.maximumf %9, %10 : vector<8x30xf32>
    %c0_11 = arith.constant 0 : index
    %c0_12 = arith.constant 0 : index
    %12 = vector.load %arg6[%c0_11, %c0_12] : memref<1x30xf32, #tpu.memory_space<vmem>>, vector<1x30xf32>
    %13 = vector.broadcast %12 : vector<1x30xf32> to vector<8x30xf32>
    %14 = arith.mulf %11, %13 : vector<8x30xf32>
    %cst_13 = arith.constant dense<0.000000e+00> : vector<8xf32>
    %15 = vector.multi_reduction <add>, %14, %cst_13 [1] : vector<8x30xf32> to vector<8xf32>
    %16 = vector.shape_cast %15 : vector<8xf32> to vector<8x1xf32>
    %c0_14 = arith.constant 0 : index
    %c0_15 = arith.constant 0 : index
    %17 = memref.load %arg7[%c0_14, %c0_15] : memref<1x1xf32, #tpu.memory_space<smem>>
    %18 = vector.broadcast %17 : f32 to vector<8x1xf32>
    %19 = arith.addf %16, %18 : vector<8x1xf32>
    %c0_16 = arith.constant 0 : index
    %c0_17 = arith.constant 0 : index
    %20 = vector.load %arg8[%c0_16, %c0_17] : memref<8x1xf32, #tpu.memory_space<vmem>>, vector<8x1xf32>
    tpu.vector_store %arg8[%c0_16, %c0_17], %19 {strides = array<i32>} : memref<8x1xf32, #tpu.memory_space<vmem>>, vector<8x1xf32>,
    return
  }
  func.func @transform_0(%arg0: i32) -> (i32, i32) {
    %c0_i32 = arith.constant 0 : i32
    %c0_i32_0 = arith.constant 0 : i32
    return %arg0, %c0_i32 : i32, i32
  }
  func.func @transform_1(%arg0: i32) -> (i32, i32) {
    %c0_i32 = arith.constant 0 : i32
    %c0_i32_0 = arith.constant 0 : i32
    return %arg0, %c0_i32 : i32, i32
  }
  func.func @transform_2(%arg0: i32) -> (i32, i32) {
    %c0_i32 = arith.constant 0 : i32
    %c0_i32_0 = arith.constant 0 : i32
    %c0_i32_1 = arith.constant 0 : i32
    return %c0_i32, %c0_i32_0 : i32, i32
  }
  func.func @transform_3(%arg0: i32) -> (i32, i32) {
    %c0_i32 = arith.constant 0 : i32
    %c0_i32_0 = arith.constant 0 : i32
    %c0_i32_1 = arith.constant 0 : i32
    return %c0_i32, %c0_i32_0 : i32, i32
  }
  func.func @transform_4(%arg0: i32) -> (i32, i32) {
    %c0_i32 = arith.constant 0 : i32
    %c0_i32_0 = arith.constant 0 : i32
    %c0_i32_1 = arith.constant 0 : i32
    return %c0_i32, %c0_i32_0 : i32, i32
  }
  func.func @transform_5(%arg0: i32) -> (i32, i32) {
    %c0_i32 = arith.constant 0 : i32
    %c0_i32_0 = arith.constant 0 : i32
    %c0_i32_1 = arith.constant 0 : i32
    return %c0_i32, %c0_i32_0 : i32, i32
  }
  func.func @transform_6(%arg0: i32) -> (i32, i32) {
    %c0_i32 = arith.constant 0 : i32
    %c0_i32_0 = arith.constant 0 : i32
    %c0_i32_1 = arith.constant 0 : i32
    return %c0_i32, %c0_i32_0 : i32, i32
  }
  func.func @transform_7(%arg0: i32) -> (i32, i32) {
    %c0_i32 = arith.constant 0 : i32
    %c0_i32_0 = arith.constant 0 : i32
    return %arg0, %c0_i32 : i32, i32
  }
}

</mosaic_0001>

<llo_original>
// kernel: tpu_custom_call.1
$region0: #{tpu_custom_call.1}
  #allocation0 [shape = 'u32[]', space=smem, size = 0x4, offset = 0x4, fixed_abs, tag = 'smem constant byte address 0x4 - core index']
  #allocation1 [shape = 'u32[72,128]{1,0:T(1,128)}', space=vmem, size = 0x9000, scoped, tag = 'internal scratch']
  #allocation2 [shape = 'f32[1,1]{1,0:T(1,128)S(6)}', space=smem, size = 0x200, scoped, tag = 'scoped memory for tpu_custom_call.1']
  %s0 = inlined_call_operand.vmem [shape: f32[2,16], index: 0, kind: input, shape index: {}]
  %s1 = inlined_call_operand.hbm [shape: f32[2,8], index: 1, kind: input, shape index: {}]
  %s2 = inlined_call_operand.hbm [shape: f32[16,30], index: 2, kind: input, shape index: {}]
  %s3 = inlined_call_operand.hbm [shape: f32[8,30], index: 3, kind: input, shape index: {}]
  %s4 = inlined_call_operand.vmem [shape: f32[1,30], index: 4, kind: input, shape index: {}]
  %s5 = inlined_call_operand.vmem [shape: f32[1,30], index: 5, kind: input, shape index: {}]
  %s6 = inlined_call_operand.<no memory space> [shape: f32[1,1], index: 6, kind: input, shape index: {}]
  %s7 = inlined_call_operand.vmem [shape: f32[2,1], index: 7, kind: output, shape index: {}]
  %s8 = sld [smem:[#allocation0]]
  $region80: #{tpu_custom_call.1} parent=0
    _
  %s10 = ssub.s32 1, %s8
  %s11 = scalar_select 0, %s10, %s8
  %12 = sst [smem:[#allocation2]] %s6
  $region1: #{tpu_custom_call.1} parent=0
    #allocation3 [shape = 'u8[4096]{0}', space=vmem, size = 0x1000, scoped, tag = 'input window, operand 1, single buffered']
    #allocation4 [shape = 's32[1]{0}', space=sflag, size = 0x4, scoped, tag = 'scoped memory for tpu_custom_call.1']
    #allocation5 [shape = 'u8[8192]{0}', space=vmem, size = 0x2000, scoped, tag = 'input window, operand 2, single buffered']
    #allocation6 [shape = 's32[1]{0}', space=sflag, size = 0x4, scoped, tag = 'scoped memory for tpu_custom_call.1']
    #allocation7 [shape = 'u8[4096]{0}', space=vmem, size = 0x1000, scoped, tag = 'input window, operand 3, single buffered']
    #allocation8 [shape = 'u8[4096]{0}', space=vmem, size = 0x1000, scoped, tag = 'output window, operand 0, single buffered']
    %13 = vsyncpa [#allocation4], 0
    %14 = vsyncpa [#allocation6], 0
    // Predicated region
    $region2: #{tpu_custom_call.1} parent=1 // pred_check
      _
    $region3: #{tpu_custom_call.1} parent=1 // pred_check_branch
      %16 = sbr.rel (0) target = $region5
    $region4: #{tpu_custom_call.1} parent=1 // pred_region
      _
    $region5: #{tpu_custom_call.1} parent=1 // pred_fallthru
      _
    // Predicated region
    $region6: #{tpu_custom_call.1} parent=1 // pred_check
      _
    $region7: #{tpu_custom_call.1} parent=1 // pred_check_branch
      %18 = sbr.rel (0) target = $region9
    $region8: #{tpu_custom_call.1} parent=1 // pred_region
      %20 = vsyncadd [#allocation4], 96
      %s21 = sshll.u32 %s1, 4
      %s22 = int_to_ptr.hbm [resolvable:$true] %s21
      %s23 = sshll.u32 [#allocation3], 4
      %s24 = int_to_ptr.vmem [resolvable:$true] %s23
      %29 = dma.hbm_to_vmem [thread:$0]  %s22, 32, %s24, [#allocation4], 32, 32, 2
    $region9: #{tpu_custom_call.1} parent=1 // pred_fallthru
      _
    // Predicated region
    $region10: #{tpu_custom_call.1} parent=1 // pred_check
      _
    $region11: #{tpu_custom_call.1} parent=1 // pred_check_branch
      %31 = sbr.rel (0) target = $region13
    $region12: #{tpu_custom_call.1} parent=1 // pred_region
      %33 = vsyncadd [#allocation6], 0
      %s34 = sshll.u32 %s2, 4
      %s35 = int_to_ptr.hbm [resolvable:$true] %s34
      %s36 = sshll.u32 [#allocation5], 4
      %s37 = int_to_ptr.vmem [resolvable:$true] %s36
      %42 = dma.hbm_to_vmem [thread:$0]  %s35, 256, %s37, [#allocation6], 128, 128, 8
    $region13: #{tpu_custom_call.1} parent=1 // pred_fallthru
      _
    // Predicated region
    $region14: #{tpu_custom_call.1} parent=1 // pred_check
      _
    $region15: #{tpu_custom_call.1} parent=1 // pred_check_branch
      %44 = sbr.rel (0) target = $region17
    $region16: #{tpu_custom_call.1} parent=1 // pred_region
      %46 = vsyncadd [#allocation6], 0
      %s48 = sshll.u32 %s3, 4
      %s49 = int_to_ptr.hbm [resolvable:$true] %s48
      %s50 = sshll.u32 [#allocation7], 4
      %s51 = int_to_ptr.vmem [resolvable:$true] %s50
      %53 = dma.hbm_to_vmem [thread:$0]  %s49, 128, %s51, [#allocation6]
    $region17: #{tpu_custom_call.1} parent=1 // pred_fallthru
      _
    // Predicated region
    $region18: #{tpu_custom_call.1} parent=1 // pred_check
      _
    $region19: #{tpu_custom_call.1} parent=1 // pred_check_branch
      %55 = sbr.rel (0) target = $region21
    $region20: #{tpu_custom_call.1} parent=1 // pred_region
      _
    $region21: #{tpu_custom_call.1} parent=1 // pred_fallthru
      _
    // Predicated region
    $region22: #{tpu_custom_call.1} parent=1 // pred_check
      _
    $region23: #{tpu_custom_call.1} parent=1 // pred_check_branch
      %57 = sbr.rel (0) target = $region25
    $region24: #{tpu_custom_call.1} parent=1 // pred_region
      _
    $region25: #{tpu_custom_call.1} parent=1 // pred_fallthru
      _
    // Predicated region
    $region26: #{tpu_custom_call.1} parent=1 // pred_check
      _
    $region27: #{tpu_custom_call.1} parent=1 // pred_check_branch
      %59 = sbr.rel (0) target = $region29
    $region28: #{tpu_custom_call.1} parent=1 // pred_region
      _
    $region29: #{tpu_custom_call.1} parent=1 // pred_fallthru
      _
    // Predicated region
    $region30: #{tpu_custom_call.1} parent=1 // pred_check
      _
    $region31: #{tpu_custom_call.1} parent=1 // pred_check_branch
      %61 = sbr.rel (0) target = $region33
    $region32: #{tpu_custom_call.1} parent=1 // pred_region
      %63 = dma.done [#allocation4], 128
    $region33: #{tpu_custom_call.1} parent=1 // pred_fallthru
      _
    // Predicated region
    $region34: #{tpu_custom_call.1} parent=1 // pred_check
      _
    $region35: #{tpu_custom_call.1} parent=1 // pred_check_branch
      %65 = sbr.rel (0) target = $region37
    $region36: #{tpu_custom_call.1} parent=1 // pred_region
      %67 = dma.done [#allocation6], 256
    $region37: #{tpu_custom_call.1} parent=1 // pred_fallthru
      _
    // Predicated region
    $region38: #{tpu_custom_call.1} parent=1 // pred_check
      _
    $region39: #{tpu_custom_call.1} parent=1 // pred_check_branch
      %69 = sbr.rel (0) target = $region41
    $region40: #{tpu_custom_call.1} parent=1 // pred_region
      %71 = dma.done [#allocation6], 128
    $region41: #{tpu_custom_call.1} parent=1 // pred_fallthru
      _
    %v72 = vld [vmem:[%s0] sm:$0xff]
    %v73 = vld [vmem:[#allocation5] sm:$0xff]
    %v74 = vld [vmem:[#allocation5 + $0x8] sm:$0xff]
    %v75 = vld [vmem:[#allocation3] sm:$0xff]
    %v76 = vld [vmem:[#allocation7] sm:$0xff]
    %vm77 = vcmask 64512
    %v79 = vsel %vm77, %v75, 0
    %81 = vmatpush.msra.mxu0 0.0
    %82 = vmatpush.msra.mxu0 0.0
    %83 = vmatpush.msra.mxu0 0.0
    %84 = vmatpush.msra.mxu0 0.0
    %85 = vmatpush.msra.mxu0 0.0
    %86 = vmatpush.msra.mxu0 0.0
    %87 = vmatpush.msra.mxu0 0.0
    %88 = vmatpush.msra.mxu0 0.0
    %89 = vmatpush.msra.mxu0 0.0
    %90 = vmatpush.msra.mxu0 0.0
    %91 = vmatpush.msra.mxu0 0.0
    %92 = vmatpush.msra.mxu0 0.0
    %93 = vmatpush.msra.mxu0 0.0
    %94 = vmatpush.msra.mxu0 0.0
    %95 = vmatpush.msra.mxu0 0.0
    %96 = vmatpush.msra.mxu0 %v76
    %97 = vmatmul.f32.gmra.mxu0 %v79
    %v98 = vpop.f32.mrf.mxu0
    %v99 = vadd.f32 0.0, %v98
    %100 = vdwg.mxu0
    %vm101 = vcmask 130048
    %v103 = vsel %vm101, %v72, 0
    %105 = vmatpush.msra.mxu0 0.0
    %106 = vmatpush.msra.mxu0 0.0
    %107 = vmatpush.msra.mxu0 0.0
    %108 = vmatpush.msra.mxu0 0.0
    %109 = vmatpush.msra.mxu0 0.0
    %110 = vmatpush.msra.mxu0 0.0
    %111 = vmatpush.msra.mxu0 0.0
    %112 = vmatpush.msra.mxu0 0.0
    %113 = vmatpush.msra.mxu0 0.0
    %114 = vmatpush.msra.mxu0 0.0
    %115 = vmatpush.msra.mxu0 0.0
    %116 = vmatpush.msra.mxu0 0.0
    %117 = vmatpush.msra.mxu0 0.0
    %118 = vmatpush.msra.mxu0 0.0
    %119 = vmatpush.msra.mxu0 %v74
    %120 = vmatpush.msra.mxu0 %v73
    %121 = vmatmul.f32.gmra.mxu0 %v103
    %v122 = vpop.f32.mrf.mxu0
    %v123 = vadd.f32 %v99, %v122
    %124 = vdwg.mxu0
    %v125 = vld [vmem:[%s4] sm:$0x1]
    %v127 = vperm.slane %v125, 0
    %v129 = vadd.f32 %v123, %v127
    %v130 = vmax.f32 %v129, 0.0
    %v131 = vld [vmem:[%s5] sm:$0x1]
    %v133 = vperm.slane %v131, 0
    %v135 = vmul.f32 %v130, %v133
    %vm136 = vcmask 244736
    %v137 = vsel %vm136, %v135, 0.0
    %138 = vadd.xlane.f32.xlu0 %v137
    %v139 = vpop.xlane.xlu0 %138
    %s140 = sld [smem:[#allocation2]]
    %v141 = vstv %s140
    %v142 = vadd.f32 %v139, %v141
    %vm143 = vcmask 7168
    %144 = vst.msk [vmem:[#allocation8] sm:$0xff] %vm143, %v142
    // Predicated region
    $region42: #{tpu_custom_call.1} parent=1 // pred_check
      _
    $region43: #{tpu_custom_call.1} parent=1 // pred_check_branch
      %146 = sbr.rel (0) target = $region45
    $region44: #{tpu_custom_call.1} parent=1 // pred_region
      // Predicated region
      $region46: #{tpu_custom_call.1} parent=44 // pred_check
        _
      $region47: #{tpu_custom_call.1} parent=44 // pred_check_branch
        %148 = sbr.rel (0) target = $region49
      $region48: #{tpu_custom_call.1} parent=44 // pred_region
        // Predicated region
        $region50: #{tpu_custom_call.1} parent=48 // pred_check
          _
        $region51: #{tpu_custom_call.1} parent=48 // pred_check_branch
          %150 = sbr.rel target = $region53
        $region52: #{tpu_custom_call.1} parent=48 // pred_region
          // Predicated region
          $region65: #{tpu_custom_call.1} parent=52 // pred_check
            _
          $region66: #{tpu_custom_call.1} parent=52 // pred_check_branch
            %166 = sbr.rel (0) target = $region68
          $region67: #{tpu_custom_call.1} parent=52 // pred_region
            %s168 = ssub.s32 4, 1
            loop: start=0, step=1, limit=1
            $region69: #{tpu_custom_call.1} parent=67 // loop_pre_header
              _
            $region70: #{tpu_custom_call.1} parent=67 // loop_header
              %s170 = sphi 0, %s174
              %p171 = scmp.ge.s32.totalorder %s170, 1
              %s175 = sphi [#allocation8], [#allocation8]
              %s176 = sphi %s7, %s7
            $region71: #{tpu_custom_call.1} parent=67 // loop_header_branch
              %173 = sbr.rel (%p171) target = $region75
            $region72: #{tpu_custom_call.1} parent=67 // loop_body
              %v177 = vld [vmem:[%s175] sm:%s168]
              %178 = vst [vmem:[%s176] sm:%s168] %v177
            $region73: #{tpu_custom_call.1} parent=67 // loop_footer
              %s174 = sadd.s32 1, %s170
            $region74: #{tpu_custom_call.1} parent=67 // loop_footer_branch
              %169 = sbr.rel target = $region70
            $region75: #{tpu_custom_call.1} parent=67 // loop_exit
              _
          $region68: #{tpu_custom_call.1} parent=52 // pred_fallthru
            _
        $region53: #{tpu_custom_call.1} parent=48 // pred_fallthru
          _
        // Predicated region
        $region54: #{tpu_custom_call.1} parent=48 // pred_check
          _
        $region55: #{tpu_custom_call.1} parent=48 // pred_check_branch
          %152 = sbr.rel (0) target = $region57
        $region56: #{tpu_custom_call.1} parent=48 // pred_region
          %s154 = ssub.s32 4, 1
          loop: start=0, step=1, limit=1
          $region58: #{tpu_custom_call.1} parent=56 // loop_pre_header
            _
          $region59: #{tpu_custom_call.1} parent=56 // loop_header
            %s156 = sphi 0, %s160
            %p157 = scmp.ge.s32.totalorder %s156, 1
            %s161 = sphi [#allocation8], [#allocation8]
            %s162 = sphi %s7, %s7
          $region60: #{tpu_custom_call.1} parent=56 // loop_header_branch
            %159 = sbr.rel (%p157) target = $region64
          $region61: #{tpu_custom_call.1} parent=56 // loop_body
            %v163 = vld [vmem:[%s161] sm:%s154]
            %164 = vst [vmem:[%s162] sm:%s154] %v163
          $region62: #{tpu_custom_call.1} parent=56 // loop_footer
            %s160 = sadd.s32 1, %s156
          $region63: #{tpu_custom_call.1} parent=56 // loop_footer_branch
            %155 = sbr.rel target = $region59
          $region64: #{tpu_custom_call.1} parent=56 // loop_exit
            _
        $region57: #{tpu_custom_call.1} parent=48 // pred_fallthru
          _
      $region49: #{tpu_custom_call.1} parent=44 // pred_fallthru
        _
      %179 = vnop
    $region45: #{tpu_custom_call.1} parent=1 // pred_fallthru
      _
    // Predicated region
    $region76: #{tpu_custom_call.1} parent=1 // pred_check
      _
    $region77: #{tpu_custom_call.1} parent=1 // pred_check_branch
      %181 = sbr.rel (0) target = $region79
    $region78: #{tpu_custom_call.1} parent=1 // pred_region
      _
    $region79: #{tpu_custom_call.1} parent=1 // pred_fallthru
      _
    %182 = vsyncpa [#allocation4], 1
    %183 = vsyncpa [#allocation6], 1

</llo_original>
